<compile_context>
chip_gen: v5e
topology: v5e:2x2
jax: 0.10.0
libtpu: 0.0.40
codegen_flags: <defaults>
</compile_context>

<pallas_src>
import functools
import math

import jax
import jax.numpy as jnp
from jax.experimental import pallas as pl
from jax.experimental.pallas import tpu as pltpu


# ---------------------------------------------------------------------------
# Shared per-tile attention math (one TransformerConv layer on one row tile)
# ---------------------------------------------------------------------------
def _attend_tile(x_ref, adj_ref, wqs_ref, bqs_ref, wkv_ref, bkv_ref,
                 num_heads, head_dim, tile_m):
    i = pl.program_id(0)
    row0 = pl.multiple_of(i * tile_m, tile_m)
    x_t = x_ref[pl.ds(row0, tile_m), :]                       # [TM, Din] target rows

    # Fused lane-dense projections (single matmul each instead of 3*H small ones).
    qs = jnp.dot(x_t, wqs_ref[...],
                 preferred_element_type=jnp.float32) + bqs_ref[...]   # [TM, H*C + hidden]
    # TODO(synk): for large N, hoist the K/V projection into its own pass /
    # scratch so it is not recomputed per target tile (kept here so the row axis
    # can stay 'parallel' for megacore).
    kv = jnp.dot(x_ref[...], wkv_ref[...],
                 preferred_element_type=jnp.float32) + bkv_ref[...]   # [N, 2*H*C]

    # Mask work hoisted out of the head loop (O(TM*N) once, not per head).
    adj = adj_ref[...].astype(jnp.float32)                    # bf16 0/1 -> f32 (exact)
    neg = (1.0 - adj) * jnp.float32(-1e30)                    # additive mask
    has_edge = jnp.sum(adj, axis=-1, keepdims=True) > 0.0     # isolated-node guard

    hc = num_heads * head_dim
    acc = qs[:, hc:]                                          # skip (root_weight) term
    for h in range(num_heads):                                # small static unroll
        q = qs[:, h * head_dim:(h + 1) * head_dim]            # already * 1/sqrt(C)
        k = kv[:, h * head_dim:(h + 1) * head_dim]
        v = kv[:, hc + h * head_dim: hc + (h + 1) * head_dim]  # already * 1/H
        s = jax.lax.dot_general(q, k, (((1,), (1,)), ((), ())),
                                preferred_element_type=jnp.float32) + neg  # [TM, N]
        m = jnp.max(s, axis=-1, keepdims=True)
        e = jnp.exp(s - m)                                    # exact 0 on non-edges (f32 underflow)
        denom = jnp.sum(e, axis=-1, keepdims=True)            # >= 1 where has_edge
        inv = jnp.where(has_edge, pl.reciprocal(denom, approx=True), 0.0)
        acc = acc + jnp.dot(e * inv, v, preferred_element_type=jnp.float32)
    return jnp.maximum(acc, 0.0)                              # ReLU


# ---------------------------------------------------------------------------
# Pallas kernels
# ---------------------------------------------------------------------------
def conv_layer_kernel(x_ref, adj_ref, wqs_ref, bqs_ref, wkv_ref, bkv_ref, out_ref,
                      *, num_heads, head_dim, tile_m):
    out_ref[...] = _attend_tile(x_ref, adj_ref, wqs_ref, bqs_ref, wkv_ref, bkv_ref,
                                num_heads, head_dim, tile_m)


def conv_pool_classify_kernel(x_ref, adj_ref, oh_ref, invc_ref,
                              wqs_ref, bqs_ref, wkv_ref, bkv_ref, wc_ref, bc_ref,
                              out_ref, pool_acc,
                              *, num_heads, head_dim, tile_m):
    """Last conv layer fused with global_mean_pool and the Linear classifier."""
    i = pl.program_id(0)

    @pl.when(i == 0)
    def _():
        pool_acc[...] = jnp.zeros_like(pool_acc)

    h_tile = _attend_tile(x_ref, adj_ref, wqs_ref, bqs_ref, wkv_ref, bkv_ref,
                          num_heads, head_dim, tile_m)        # [TM, hidden]
    # one-hot^T (node-major) @ features -> per-graph partial sums
    pool_acc[...] += jax.lax.dot_general(oh_ref[...], h_tile, (((0,), (0,)), ((), ())),
                                         preferred_element_type=jnp.float32)

    @pl.when(i == pl.num_programs(0) - 1)
    def _():
        pooled = pool_acc[...] * invc_ref[...]                # mean pool
        out_ref[...] = (jnp.dot(pooled, wc_ref[...],
                                preferred_element_type=jnp.float32) + bc_ref[...])


# ---------------------------------------------------------------------------
# Wrappers
# ---------------------------------------------------------------------------
def transformer_conv(x, adj, fused, *, num_heads, head_dim, tile_m):
    n, d_in = x.shape
    hc = num_heads * head_dim
    hidden = fused['w_qs'].shape[1] - hc
    assert n % tile_m == 0
    kern = functools.partial(conv_layer_kernel, num_heads=num_heads,
                             head_dim=head_dim, tile_m=tile_m)
    return pl.pallas_call(
        kern,
        out_shape=jax.ShapeDtypeStruct((n, hidden), jnp.float32),
        grid=(n // tile_m,),
        in_specs=[
            pl.BlockSpec((n, d_in), lambda i: (0, 0)),            # x resident (K/V source)
            pl.BlockSpec((tile_m, n), lambda i: (i, 0)),          # adjacency row tile (bf16)
            pl.BlockSpec(fused['w_qs'].shape, lambda i: (0, 0)),
            pl.BlockSpec(fused['b_qs'].shape, lambda i: (0, 0)),
            pl.BlockSpec(fused['w_kv'].shape, lambda i: (0, 0)),
            pl.BlockSpec(fused['b_kv'].shape, lambda i: (0, 0)),
        ],
        out_specs=pl.BlockSpec((tile_m, hidden), lambda i: (i, 0)),
        compiler_params=pltpu.CompilerParams(dimension_semantics=("parallel",)),
    )(x, adj, fused['w_qs'], fused['b_qs'], fused['w_kv'], fused['b_kv'])


def conv_pool_classify(x, adj, onehot_t, inv_counts, fused, wc, bc,
                       *, num_heads, head_dim, tile_m):
    n, d_in = x.shape
    hc = num_heads * head_dim
    hidden = fused['w_qs'].shape[1] - hc
    num_graphs = onehot_t.shape[1]
    out_dim = wc.shape[1]
    assert n % tile_m == 0
    kern = functools.partial(conv_pool_classify_kernel, num_heads=num_heads,
                             head_dim=head_dim, tile_m=tile_m)
    return pl.pallas_call(
        kern,
        out_shape=jax.ShapeDtypeStruct((num_graphs, out_dim), jnp.float32),
        grid=(n // tile_m,),
        in_specs=[
            pl.BlockSpec((n, d_in), lambda i: (0, 0)),
            pl.BlockSpec((tile_m, n), lambda i: (i, 0)),
            pl.BlockSpec((tile_m, num_graphs), lambda i: (i, 0)),  # onehot^T row tile
            pl.BlockSpec((num_graphs, 1), lambda i: (0, 0)),       # 1/node-count per graph
            pl.BlockSpec(fused['w_qs'].shape, lambda i: (0, 0)),
            pl.BlockSpec(fused['b_qs'].shape, lambda i: (0, 0)),
            pl.BlockSpec(fused['w_kv'].shape, lambda i: (0, 0)),
            pl.BlockSpec(fused['b_kv'].shape, lambda i: (0, 0)),
            pl.BlockSpec(wc.shape, lambda i: (0, 0)),
            pl.BlockSpec(bc.shape, lambda i: (0, 0)),
        ],
        out_specs=pl.BlockSpec((num_graphs, out_dim), lambda i: (0, 0)),
        scratch_shapes=[pltpu.VMEM((num_graphs, hidden), jnp.float32)],
        compiler_params=pltpu.CompilerParams(dimension_semantics=("arbitrary",)),
    )(x, adj, onehot_t, inv_counts, fused['w_qs'], fused['b_qs'],
      fused['w_kv'], fused['b_kv'], wc, bc)


def forward(x, adj, onehot_t, inv_counts, fused_layers, wc, bc,
            *, num_heads, head_dim, tile_m):
    for lp in fused_layers[:-1]:
        x = transformer_conv(x, adj, lp, num_heads=num_heads,
                             head_dim=head_dim, tile_m=tile_m)
    return conv_pool_classify(x, adj, onehot_t, inv_counts, fused_layers[-1], wc, bc,
                              num_heads=num_heads, head_dim=head_dim, tile_m=tile_m)


# ---------------------------------------------------------------------------
# Parameter init (raw, matching the PyTorch module shapes) + one-time fusion
# ---------------------------------------------------------------------------
def init_params(key, input_dim, hidden_dim, output_dim, num_layers, num_heads):
    params = {'layers': []}
    d_in = input_dim
    for _ in range(num_layers):
        key, *ks = jax.random.split(key, 9)
        s = 1.0 / math.sqrt(d_in)
        layer = dict(
            wq=jax.random.uniform(ks[0], (num_heads, d_in, hidden_dim), jnp.float32, -s, s),
            bq=jax.random.uniform(ks[1], (num_heads, 1, hidden_dim), jnp.float32, -s, s),
            wk=jax.random.uniform(ks[2], (num_heads, d_in, hidden_dim), jnp.float32, -s, s),
            bk=jax.random.uniform(ks[3], (num_heads, 1, hidden_dim), jnp.float32, -s, s),
            wv=jax.random.uniform(ks[4], (num_heads, d_in, hidden_dim), jnp.float32, -s, s),
            bv=jax.random.uniform(ks[5], (num_heads, 1, hidden_dim), jnp.float32, -s, s),
            ws=jax.random.uniform(ks[6], (d_in, hidden_dim), jnp.float32, -s, s),
            bs=jax.random.uniform(ks[7], (1, hidden_dim), jnp.float32, -s, s),
        )
        params['layers'].append(layer)
        d_in = hidden_dim
    key, k1, k2 = jax.random.split(key, 3)
    s = 1.0 / math.sqrt(hidden_dim)
    params['wc'] = jax.random.uniform(k1, (hidden_dim, output_dim), jnp.float32, -s, s)
    params['bc'] = jax.random.uniform(k2, (1, output_dim), jnp.float32, -s, s)
    return params


def fuse_layer(lp):
    """One-time host-side weight fusion: [Wq/sqrt(C) | Wskip], [Wk | Wv/H]."""
    num_heads, d_in, c = lp['wq'].shape
    scale = 1.0 / math.sqrt(c)
    wq = (lp['wq'] * scale).transpose(1, 0, 2).reshape(d_in, num_heads * c)
    bq = (lp['bq'] * scale).reshape(1, num_heads * c)
    wk = lp['wk'].transpose(1, 0, 2).reshape(d_in, num_heads * c)
    bk = lp['bk'].reshape(1, num_heads * c)
    wv = (lp['wv'] / num_heads).transpose(1, 0, 2).reshape(d_in, num_heads * c)
    bv = (lp['bv'] / num_heads).reshape(1, num_heads * c)
    return dict(
        w_qs=jnp.concatenate([wq, lp['ws']], axis=1),
        b_qs=jnp.concatenate([bq, lp['bs']], axis=1),
        w_kv=jnp.concatenate([wk, wv], axis=1),
        b_kv=jnp.concatenate([bk, bv], axis=1),
    )


# ---------------------------------------------------------------------------
# Pure-JAX reference (identical module semantics) for correctness check
# ---------------------------------------------------------------------------
def reference_forward(x, adj, onehot, params):
    for lp in params['layers']:
        hidden = lp['wq'].shape[-1]
        q = jnp.einsum('nd,hdc->hnc', x, lp['wq']) + lp['bq']
        k = jnp.einsum('nd,hdc->hnc', x, lp['wk']) + lp['bk']
        v = jnp.einsum('nd,hdc->hnc', x, lp['wv']) + lp['bv']
        scores = jnp.einsum('hic,hjc->hij', q, k) / math.sqrt(hidden)
        masked = jnp.where(adj[None] > 0.0, scores, -1e30)
        m = jnp.max(masked, axis=-1, keepdims=True)
        e = jnp.exp(masked - m) * adj[None]
        denom = jnp.sum(e, axis=-1, keepdims=True)
        alpha = e / jnp.where(denom == 0.0, 1.0, denom)
        agg = jnp.einsum('hij,hjc->hic', alpha, v)
        x = jnp.maximum(agg.mean(axis=0) + x @ lp['ws'] + lp['bs'], 0.0)
    counts = onehot.sum(axis=1, keepdims=True)
    pooled = (onehot @ x) / jnp.maximum(counts, 1.0)
    return pooled @ params['wc'] + params['bc']


# ---------------------------------------------------------------------------
if __name__ == "__main__":
    INPUT_DIM, HIDDEN_DIM, OUTPUT_DIM = 8, 16, 4
    NUM_LAYERS, NUM_HEADS = 2, 4
    N_PER_GRAPH, NUM_GRAPHS = 16, 2
    N = N_PER_GRAPH * NUM_GRAPHS
    TILE_M = 16                                  # target-row tile -> grid of 2

    key = jax.random.PRNGKey(0)
    key, kx = jax.random.split(key)
    x = jax.random.normal(kx, (N, INPUT_DIM), jnp.float32)

    # Deterministic edge_index (PyG convention: row 0 = source, row 1 = target).
    # Bidirectional ring within each graph; node 3 is made target-isolated to
    # exercise the softmax-over-empty-neighborhood path.
    src, dst = [], []
    for g in range(NUM_GRAPHS):
        base = g * N_PER_GRAPH
        for i in range(N_PER_GRAPH):
            a, b = base + i, base + (i + 1) % N_PER_GRAPH
            for s_, d_ in ((a, b), (b, a)):
                if d_ != 3:
                    src.append(s_)
                    dst.append(d_)
    edge_index = jnp.array([src, dst], dtype=jnp.int32)
    batch = jnp.array([g for g in range(NUM_GRAPHS) for _ in range(N_PER_GRAPH)],
                      dtype=jnp.int32)

    # Glue: dense adjacency (target-major). f32 for the reference, bf16 (exact 0/1)
    # for the kernel to halve the O(N^2) bandwidth/VMEM term.
    adj_f32 = jnp.zeros((N, N), jnp.float32).at[edge_index[1], edge_index[0]].set(1.0)
    adj_bf16 = adj_f32.astype(jnp.bfloat16)
    onehot = (batch[None, :] == jnp.arange(NUM_GRAPHS)[:, None]).astype(jnp.float32)
    onehot_t = onehot.T                                          # [N, B] node-major
    inv_counts = 1.0 / jnp.maximum(onehot.sum(axis=1, keepdims=True), 1.0)  # [B, 1]

    params = init_params(key, INPUT_DIM, HIDDEN_DIM, OUTPUT_DIM, NUM_LAYERS, NUM_HEADS)
    fused_layers = [fuse_layer(lp) for lp in params['layers']]   # one-time host fusion

    out = forward(x, adj_bf16, onehot_t, inv_counts, fused_layers,
                  params['wc'], params['bc'],
                  num_heads=NUM_HEADS, head_dim=HIDDEN_DIM, tile_m=TILE_M)
    out = jax.block_until_ready(out)

    ref = reference_forward(x, adj_f32, onehot, params)
    assert out.shape == (NUM_GRAPHS, OUTPUT_DIM), out.shape
    # slightly looser tolerance than pure-f32: softmax uses the EUP approx reciprocal
    assert jnp.allclose(out, ref, atol=2e-3, rtol=2e-3), (out, ref)
    print("KERNEL_OK")
</pallas_src>

<mosaic_0001>
module attributes {stable_mosaic.version = 11 : i64} {
  func.func @conv_layer_kernel(%arg0: i32, %arg1: memref<32x8xf32, #tpu.memory_space<vmem>>, %arg2: memref<16x32xbf16, #tpu.memory_space<vmem>>, %arg3: memref<8x80xf32, #tpu.memory_space<vmem>>, %arg4: memref<1x80xf32, #tpu.memory_space<vmem>>, %arg5: memref<8x128xf32, #tpu.memory_space<vmem>>, %arg6: memref<1x128xf32, #tpu.memory_space<vmem>>, %arg7: memref<16x16xf32, #tpu.memory_space<vmem>>) attributes {dimension_semantics = [#tpu.dimension_semantics<parallel>], iteration_bounds = array<i64: 2>, scalar_prefetch = 0 : i64, scratch_operands = 0 : i64, tpu.core_type = #tpu.core_type<tc>, window_params = [{pipeline_mode = #tpu.pipeline_mode<synchronous>, transform_indices = @transform_0, window_bounds = array<i64: 32, 8>}, {transform_indices = @transform_1, window_bounds = array<i64: 16, 32>}, {pipeline_mode = #tpu.pipeline_mode<synchronous>, transform_indices = @transform_2, window_bounds = array<i64: 8, 80>}, {pipeline_mode = #tpu.pipeline_mode<synchronous>, transform_indices = @transform_3, window_bounds = array<i64: 1, 80>}, {pipeline_mode = #tpu.pipeline_mode<synchronous>, transform_indices = @transform_4, window_bounds = array<i64: 8, 128>}, {pipeline_mode = #tpu.pipeline_mode<synchronous>, transform_indices = @transform_5, window_bounds = array<i64: 1, 128>}, {transform_indices = @transform_6, window_bounds = array<i64: 16, 16>}]} {
    %c16_i32 = arith.constant 16 : i32
    %0 = arith.muli %arg0, %c16_i32 : i32
    %1 = tpu.assume_multiple %0, 16 : i32
    %2 = arith.index_cast %1 : i32 to index
    %c0 = arith.constant 0 : index
    %3 = vector.load %arg1[%2, %c0] : memref<32x8xf32, #tpu.memory_space<vmem>>, vector<16x8xf32>
    %c0_0 = arith.constant 0 : index
    %c0_1 = arith.constant 0 : index
    %4 = vector.load %arg3[%c0_0, %c0_1] : memref<8x80xf32, #tpu.memory_space<vmem>>, vector<8x80xf32>
    %cst = arith.constant dense<0.000000e+00> : vector<16x80xf32>
    %5 = tpu.matmul %3, %4, %cst {dimension_numbers = #tpu.dot_dimension_numbers<[1], [0], [0], [1], [0, 0, 1, 1], [], []>} : vector<16x8xf32>, vector<8x80xf32>, vector<16x80xf32> -> vector<16x80xf32>
    %c0_2 = arith.constant 0 : index
    %c0_3 = arith.constant 0 : index
    %6 = vector.load %arg4[%c0_2, %c0_3] : memref<1x80xf32, #tpu.memory_space<vmem>>, vector<1x80xf32>
    %7 = vector.broadcast %6 : vector<1x80xf32> to vector<16x80xf32>
    %8 = arith.addf %5, %7 : vector<16x80xf32>
    %c0_4 = arith.constant 0 : index
    %c0_5 = arith.constant 0 : index
    %9 = vector.load %arg1[%c0_4, %c0_5] : memref<32x8xf32, #tpu.memory_space<vmem>>, vector<32x8xf32>
    %c0_6 = arith.constant 0 : index
    %c0_7 = arith.constant 0 : index
    %10 = vector.load %arg5[%c0_6, %c0_7] : memref<8x128xf32, #tpu.memory_space<vmem>>, vector<8x128xf32>
    %cst_8 = arith.constant dense<0.000000e+00> : vector<32x128xf32>
    %11 = tpu.matmul %9, %10, %cst_8 {dimension_numbers = #tpu.dot_dimension_numbers<[1], [0], [0], [1], [0, 0, 1, 1], [], []>} : vector<32x8xf32>, vector<8x128xf32>, vector<32x128xf32> -> vector<32x128xf32>
    %c0_9 = arith.constant 0 : index
    %c0_10 = arith.constant 0 : index
    %12 = vector.load %arg6[%c0_9, %c0_10] : memref<1x128xf32, #tpu.memory_space<vmem>>, vector<1x128xf32>
    %13 = vector.broadcast %12 : vector<1x128xf32> to vector<32x128xf32>
    %14 = arith.addf %11, %13 : vector<32x128xf32>
    %c0_11 = arith.constant 0 : index
    %c0_12 = arith.constant 0 : index
    %15 = vector.load %arg2[%c0_11, %c0_12] : memref<16x32xbf16, #tpu.memory_space<vmem>>, vector<16x32xbf16>
    %16 = arith.extf %15 : vector<16x32xbf16> to vector<16x32xf32>
    %cst_13 = arith.constant 1.000000e+00 : f32
    %17 = vector.broadcast %cst_13 : f32 to vector<16x32xf32>
    %18 = arith.subf %17, %16 : vector<16x32xf32>
    %cst_14 = arith.constant -1.000000e+30 : f32
    %19 = vector.broadcast %cst_14 : f32 to vector<16x32xf32>
    %20 = arith.mulf %18, %19 : vector<16x32xf32>
    %cst_15 = arith.constant dense<0.000000e+00> : vector<16xf32>
    %21 = vector.multi_reduction <add>, %16, %cst_15 [1] : vector<16x32xf32> to vector<16xf32>
    %22 = vector.shape_cast %21 : vector<16xf32> to vector<16x1xf32>
    %cst_16 = arith.constant 0.000000e+00 : f32
    %23 = vector.broadcast %cst_16 : f32 to vector<16x1xf32>
    %24 = arith.cmpf ogt, %22, %23 : vector<16x1xf32>
    %25 = vector.extract_strided_slice %8 {offsets = [0, 64], sizes = [16, 16], strides = [1, 1]} : vector<16x80xf32> to vector<16x16xf32>
    %26 = vector.extract_strided_slice %8 {offsets = [0, 0], sizes = [16, 16], strides = [1, 1]} : vector<16x80xf32> to vector<16x16xf32>
    %27 = vector.extract_strided_slice %14 {offsets = [0, 0], sizes = [32, 16], strides = [1, 1]} : vector<32x128xf32> to vector<32x16xf32>
    %28 = vector.extract_strided_slice %14 {offsets = [0, 64], sizes = [32, 16], strides = [1, 1]} : vector<32x128xf32> to vector<32x16xf32>
    %cst_17 = arith.constant dense<0.000000e+00> : vector<16x32xf32>
    %29 = tpu.matmul %26, %27, %cst_17 {dimension_numbers = #tpu.dot_dimension_numbers<[1], [1], [0], [0], [0, 0, 1, 0], [], []>} : vector<16x16xf32>, vector<32x16xf32>, vector<16x32xf32> -> vector<16x32xf32>
    %30 = arith.addf %29, %20 : vector<16x32xf32>
    %cst_18 = arith.constant dense<0xFF800000> : vector<16xf32>
    %31 = vector.multi_reduction <maximumf>, %30, %cst_18 [1] : vector<16x32xf32> to vector<16xf32>
    %32 = vector.shape_cast %31 : vector<16xf32> to vector<16x1xf32>
    %33 = vector.broadcast %32 : vector<16x1xf32> to vector<16x32xf32>
    %34 = arith.subf %30, %33 : vector<16x32xf32>
    %35 = math.exp %34 : vector<16x32xf32>
    %cst_19 = arith.constant dense<0.000000e+00> : vector<16xf32>
    %36 = vector.multi_reduction <add>, %35, %cst_19 [1] : vector<16x32xf32> to vector<16xf32>
    %37 = vector.shape_cast %36 : vector<16xf32> to vector<16x1xf32>
    %38 = tpu.reciprocal %37 {approx = true} : vector<16x1xf32> -> vector<16x1xf32>
    %cst_20 = arith.constant 0.000000e+00 : f32
    %39 = vector.broadcast %cst_20 : f32 to vector<16x1xf32>
    %40 = arith.select %24, %38, %39 : vector<16x1xi1>, vector<16x1xf32>
    %41 = vector.broadcast %40 : vector<16x1xf32> to vector<16x32xf32>
    %42 = arith.mulf %35, %41 : vector<16x32xf32>
    %cst_21 = arith.constant dense<0.000000e+00> : vector<16x16xf32>
    %43 = tpu.matmul %42, %28, %cst_21 {dimension_numbers = #tpu.dot_dimension_numbers<[1], [0], [0], [1], [0, 0, 1, 1], [], []>} : vector<16x32xf32>, vector<32x16xf32>, vector<16x16xf32> -> vector<16x16xf32>
    %44 = arith.addf %25, %43 : vector<16x16xf32>
    %45 = vector.extract_strided_slice %8 {offsets = [0, 16], sizes = [16, 16], strides = [1, 1]} : vector<16x80xf32> to vector<16x16xf32>
    %46 = vector.extract_strided_slice %14 {offsets = [0, 16], sizes = [32, 16], strides = [1, 1]} : vector<32x128xf32> to vector<32x16xf32>
    %47 = vector.extract_strided_slice %14 {offsets = [0, 80], sizes = [32, 16], strides = [1, 1]} : vector<32x128xf32> to vector<32x16xf32>
    %cst_22 = arith.constant dense<0.000000e+00> : vector<16x32xf32>
    %48 = tpu.matmul %45, %46, %cst_22 {dimension_numbers = #tpu.dot_dimension_numbers<[1], [1], [0], [0], [0, 0, 1, 0], [], []>} : vector<16x16xf32>, vector<32x16xf32>, vector<16x32xf32> -> vector<16x32xf32>
    %49 = arith.addf %48, %20 : vector<16x32xf32>
    %cst_23 = arith.constant dense<0xFF800000> : vector<16xf32>
    %50 = vector.multi_reduction <maximumf>, %49, %cst_23 [1] : vector<16x32xf32> to vector<16xf32>
    %51 = vector.shape_cast %50 : vector<16xf32> to vector<16x1xf32>
    %52 = vector.broadcast %51 : vector<16x1xf32> to vector<16x32xf32>
    %53 = arith.subf %49, %52 : vector<16x32xf32>
    %54 = math.exp %53 : vector<16x32xf32>
    %cst_24 = arith.constant dense<0.000000e+00> : vector<16xf32>
    %55 = vector.multi_reduction <add>, %54, %cst_24 [1] : vector<16x32xf32> to vector<16xf32>
    %56 = vector.shape_cast %55 : vector<16xf32> to vector<16x1xf32>
    %57 = tpu.reciprocal %56 {approx = true} : vector<16x1xf32> -> vector<16x1xf32>
    %cst_25 = arith.constant 0.000000e+00 : f32
    %58 = vector.broadcast %cst_25 : f32 to vector<16x1xf32>
    %59 = arith.select %24, %57, %58 : vector<16x1xi1>, vector<16x1xf32>
    %60 = vector.broadcast %59 : vector<16x1xf32> to vector<16x32xf32>
    %61 = arith.mulf %54, %60 : vector<16x32xf32>
    %cst_26 = arith.constant dense<0.000000e+00> : vector<16x16xf32>
    %62 = tpu.matmul %61, %47, %cst_26 {dimension_numbers = #tpu.dot_dimension_numbers<[1], [0], [0], [1], [0, 0, 1, 1], [], []>} : vector<16x32xf32>, vector<32x16xf32>, vector<16x16xf32> -> vector<16x16xf32>
    %63 = arith.addf %44, %62 : vector<16x16xf32>
    %64 = vector.extract_strided_slice %8 {offsets = [0, 32], sizes = [16, 16], strides = [1, 1]} : vector<16x80xf32> to vector<16x16xf32>
    %65 = vector.extract_strided_slice %14 {offsets = [0, 32], sizes = [32, 16], strides = [1, 1]} : vector<32x128xf32> to vector<32x16xf32>
    %66 = vector.extract_strided_slice %14 {offsets = [0, 96], sizes = [32, 16], strides = [1, 1]} : vector<32x128xf32> to vector<32x16xf32>
    %cst_27 = arith.constant dense<0.000000e+00> : vector<16x32xf32>
    %67 = tpu.matmul %64, %65, %cst_27 {dimension_numbers = #tpu.dot_dimension_numbers<[1], [1], [0], [0], [0, 0, 1, 0], [], []>} : vector<16x16xf32>, vector<32x16xf32>, vector<16x32xf32> -> vector<16x32xf32>
    %68 = arith.addf %67, %20 : vector<16x32xf32>
    %cst_28 = arith.constant dense<0xFF800000> : vector<16xf32>
    %69 = vector.multi_reduction <maximumf>, %68, %cst_28 [1] : vector<16x32xf32> to vector<16xf32>
    %70 = vector.shape_cast %69 : vector<16xf32> to vector<16x1xf32>
    %71 = vector.broadcast %70 : vector<16x1xf32> to vector<16x32xf32>
    %72 = arith.subf %68, %71 : vector<16x32xf32>
    %73 = math.exp %72 : vector<16x32xf32>
    %cst_29 = arith.constant dense<0.000000e+00> : vector<16xf32>
    %74 = vector.multi_reduction <add>, %73, %cst_29 [1] : vector<16x32xf32> to vector<16xf32>
    %75 = vector.shape_cast %74 : vector<16xf32> to vector<16x1xf32>
    %76 = tpu.reciprocal %75 {approx = true} : vector<16x1xf32> -> vector<16x1xf32>
    %cst_30 = arith.constant 0.000000e+00 : f32
    %77 = vector.broadcast %cst_30 : f32 to vector<16x1xf32>
    %78 = arith.select %24, %76, %77 : vector<16x1xi1>, vector<16x1xf32>
    %79 = vector.broadcast %78 : vector<16x1xf32> to vector<16x32xf32>
    %80 = arith.mulf %73, %79 : vector<16x32xf32>
    %cst_31 = arith.constant dense<0.000000e+00> : vector<16x16xf32>
    %81 = tpu.matmul %80, %66, %cst_31 {dimension_numbers = #tpu.dot_dimension_numbers<[1], [0], [0], [1], [0, 0, 1, 1], [], []>} : vector<16x32xf32>, vector<32x16xf32>, vector<16x16xf32> -> vector<16x16xf32>
    %82 = arith.addf %63, %81 : vector<16x16xf32>
    %83 = vector.extract_strided_slice %8 {offsets = [0, 48], sizes = [16, 16], strides = [1, 1]} : vector<16x80xf32> to vector<16x16xf32>
    %84 = vector.extract_strided_slice %14 {offsets = [0, 48], sizes = [32, 16], strides = [1, 1]} : vector<32x128xf32> to vector<32x16xf32>
    %85 = vector.extract_strided_slice %14 {offsets = [0, 112], sizes = [32, 16], strides = [1, 1]} : vector<32x128xf32> to vector<32x16xf32>
    %cst_32 = arith.constant dense<0.000000e+00> : vector<16x32xf32>
    %86 = tpu.matmul %83, %84, %cst_32 {dimension_numbers = #tpu.dot_dimension_numbers<[1], [1], [0], [0], [0, 0, 1, 0], [], []>} : vector<16x16xf32>, vector<32x16xf32>, vector<16x32xf32> -> vector<16x32xf32>
    %87 = arith.addf %86, %20 : vector<16x32xf32>
    %cst_33 = arith.constant dense<0xFF800000> : vector<16xf32>
    %88 = vector.multi_reduction <maximumf>, %87, %cst_33 [1] : vector<16x32xf32> to vector<16xf32>
    %89 = vector.shape_cast %88 : vector<16xf32> to vector<16x1xf32>
    %90 = vector.broadcast %89 : vector<16x1xf32> to vector<16x32xf32>
    %91 = arith.subf %87, %90 : vector<16x32xf32>
    %92 = math.exp %91 : vector<16x32xf32>
    %cst_34 = arith.constant dense<0.000000e+00> : vector<16xf32>
    %93 = vector.multi_reduction <add>, %92, %cst_34 [1] : vector<16x32xf32> to vector<16xf32>
    %94 = vector.shape_cast %93 : vector<16xf32> to vector<16x1xf32>
    %95 = tpu.reciprocal %94 {approx = true} : vector<16x1xf32> -> vector<16x1xf32>
    %cst_35 = arith.constant 0.000000e+00 : f32
    %96 = vector.broadcast %cst_35 : f32 to vector<16x1xf32>
    %97 = arith.select %24, %95, %96 : vector<16x1xi1>, vector<16x1xf32>
    %98 = vector.broadcast %97 : vector<16x1xf32> to vector<16x32xf32>
    %99 = arith.mulf %92, %98 : vector<16x32xf32>
    %cst_36 = arith.constant dense<0.000000e+00> : vector<16x16xf32>
    %100 = tpu.matmul %99, %85, %cst_36 {dimension_numbers = #tpu.dot_dimension_numbers<[1], [0], [0], [1], [0, 0, 1, 1], [], []>} : vector<16x32xf32>, vector<32x16xf32>, vector<16x16xf32> -> vector<16x16xf32>
    %101 = arith.addf %82, %100 : vector<16x16xf32>
    %cst_37 = arith.constant 0.000000e+00 : f32
    %102 = vector.broadcast %cst_37 : f32 to vector<16x16xf32>
    %103 = arith.maximumf %101, %102 : vector<16x16xf32>
    %c0_38 = arith.constant 0 : index
    %c0_39 = arith.constant 0 : index
    %104 = vector.load %arg7[%c0_38, %c0_39] : memref<16x16xf32, #tpu.memory_space<vmem>>, vector<16x16xf32>
    tpu.vector_store %arg7[%c0_38, %c0_39], %103 {strides = array<i32>} : memref<16x16xf32, #tpu.memory_space<vmem>>, vector<16x16xf32>,
    return
  }
  func.func @transform_0(%arg0: i32) -> (i32, i32) {
    %c0_i32 = arith.constant 0 : i32
    %c0_i32_0 = arith.constant 0 : i32
    %c0_i32_1 = arith.constant 0 : i32
    return %c0_i32, %c0_i32_0 : i32, i32
  }
  func.func @transform_1(%arg0: i32) -> (i32, i32) {
    %c0_i32 = arith.constant 0 : i32
    %c0_i32_0 = arith.constant 0 : i32
    return %arg0, %c0_i32 : i32, i32
  }
  func.func @transform_2(%arg0: i32) -> (i32, i32) {
    %c0_i32 = arith.constant 0 : i32
    %c0_i32_0 = arith.constant 0 : i32
    %c0_i32_1 = arith.constant 0 : i32
    return %c0_i32, %c0_i32_0 : i32, i32
  }
  func.func @transform_3(%arg0: i32) -> (i32, i32) {
    %c0_i32 = arith.constant 0 : i32
    %c0_i32_0 = arith.constant 0 : i32
    %c0_i32_1 = arith.constant 0 : i32
    return %c0_i32, %c0_i32_0 : i32, i32
  }
  func.func @transform_4(%arg0: i32) -> (i32, i32) {
    %c0_i32 = arith.constant 0 : i32
    %c0_i32_0 = arith.constant 0 : i32
    %c0_i32_1 = arith.constant 0 : i32
    return %c0_i32, %c0_i32_0 : i32, i32
  }
  func.func @transform_5(%arg0: i32) -> (i32, i32) {
    %c0_i32 = arith.constant 0 : i32
    %c0_i32_0 = arith.constant 0 : i32
    %c0_i32_1 = arith.constant 0 : i32
    return %c0_i32, %c0_i32_0 : i32, i32
  }
  func.func @transform_6(%arg0: i32) -> (i32, i32) {
    %c0_i32 = arith.constant 0 : i32
    %c0_i32_0 = arith.constant 0 : i32
    return %arg0, %c0_i32 : i32, i32
  }
}

</mosaic_0001>

<llo_original>
// kernel: tpu_custom_call.1
$region0: #{tpu_custom_call.1}
  #allocation0 [shape = 'u32[]', space=smem, size = 0x4, offset = 0x4, fixed_abs, tag = 'smem constant byte address 0x4 - core index']
  #allocation1 [shape = 'u32[72,128]{1,0:T(1,128)}', space=vmem, size = 0x9000, scoped, tag = 'internal scratch']
  %s0 = inlined_call_operand.vmem [shape: f32[32,8], index: 0, kind: input, shape index: {}]
  %s1 = inlined_call_operand.vmem [shape: bf16[32,32], index: 1, kind: input, shape index: {}]
  %s2 = inlined_call_operand.vmem [shape: f32[8,80], index: 2, kind: input, shape index: {}]
  %s3 = inlined_call_operand.vmem [shape: f32[1,80], index: 3, kind: input, shape index: {}]
  %s4 = inlined_call_operand.vmem [shape: f32[8,128], index: 4, kind: input, shape index: {}]
  %s5 = inlined_call_operand.vmem [shape: f32[1,128], index: 5, kind: input, shape index: {}]
  %s6 = inlined_call_operand.vmem [shape: f32[32,16], index: 6, kind: output, shape index: {}]
  %s7 = sld [smem:[#allocation0]]
  $region57: #{tpu_custom_call.1} parent=0
    _
  %s9 = ssub.s32 1, %s7
  %s10 = scalar_select 0, %s9, %s7
  loop: start=0, step=1, limit=4
  $region2: #{tpu_custom_call.1} parent=0 // loop_pre_header
    _
  $region3: #{tpu_custom_call.1} parent=0 // loop_header
    %s12 = sphi 0, %s16
    %p13 = scmp.ge.s32.totalorder %s12, 4
    %s20 = sphi 0, %s20
    %s22 = sphi 0, %s20
    %s23 = sphi 0, %s22
    %s37 = sphi 0, %s23
    %s43 = sphi 0, %s45
    %s46 = sphi 0, %s43
    %s47 = sphi 0, %s46
    %s63 = sphi 0, %s47
    %s67 = sphi 0, %s67
    %s69 = sphi 0, %s67
    %s70 = sphi 0, %s69
    %s84 = sphi 0, %s70
    %s88 = sphi 0, %s88
    %s90 = sphi 0, %s88
    %s91 = sphi 0, %s90
    %s105 = sphi 0, %s91
    %s109 = sphi 0, %s109
    %s111 = sphi 0, %s109
    %s112 = sphi 0, %s111
    %s126 = sphi 0, %s112
    %s130 = sphi 0, %s130
    %s132 = sphi 0, %s130
    %s133 = sphi 0, %s132
    %s147 = sphi 0, %s133
    %s153 = sphi 0, %s155
    %s156 = sphi 0, %s153
    %s157 = sphi 0, %s156
    %s173 = sphi 0, %s157
  $region4: #{tpu_custom_call.1} parent=0 // loop_header_branch
    %15 = sbr.rel (%p13) target = $region8
  $region5: #{tpu_custom_call.1} parent=0 // loop_body
    %s17 = ssub.s32 %s12, 1
    %s18 = ssub.s32 %s12, 2
    %s19 = sadd.s32 %s12, 1
    %s21 = sadd.s32 %s20, 1
    %p24 = scmp.eq.s32.totalorder %s12, 1
    %p25 = scmp.ne.s32.totalorder %s20, %s22
    %p26 = scmp.eq.s32.totalorder %s12, 0
    %p27 = por %p25, %p26
    %p28 = scmp.ne.s32.totalorder %s20, %s22
    %p29 = scmp.eq.s32.totalorder %s17, 1
    %p30 = por %p28, %p29
    %p31 = scmp.ne.s32.totalorder %s22, %s23
    %p32 = scmp.eq.s32.totalorder %s17, 0
    %p33 = por %p31, %p32
    %p34 = scmp.ne.s32.totalorder %s22, %s23
    %p35 = scmp.eq.s32.totalorder %s18, 1
    %p36 = por %p34, %p35
    %p38 = scmp.ne.s32.totalorder %s23, %s37
    %p39 = scmp.eq.s32.totalorder %s18, 0
    %p40 = por %p38, %p39
    %s41 = ssub.s32 %s12, %s19
    %p42 = scmp.eq.s32.totalorder %s41, 0
    %s44 = sadd.s32 %s43, 1
    %s45 = scalar_select %p42, %s43, %s44
    %p48 = pneg %p42
    %p49 = scmp.eq.s32.totalorder %s12, 1
    %p50 = por %p48, %p49
    %p51 = scmp.ne.s32.totalorder %s43, %s46
    %p52 = scmp.eq.s32.totalorder %s12, 0
    %p53 = por %p51, %p52
    %p54 = scmp.ne.s32.totalorder %s43, %s46
    %p55 = scmp.eq.s32.totalorder %s17, 1
    %p56 = por %p54, %p55
    %p57 = scmp.ne.s32.totalorder %s46, %s47
    %p58 = scmp.eq.s32.totalorder %s17, 0
    %p59 = por %p57, %p58
    %p60 = scmp.ne.s32.totalorder %s46, %s47
    %p61 = scmp.eq.s32.totalorder %s18, 1
    %p62 = por %p60, %p61
    %p64 = scmp.ne.s32.totalorder %s47, %s63
    %p65 = scmp.eq.s32.totalorder %s18, 0
    %p66 = por %p64, %p65
    %s68 = sadd.s32 %s67, 1
    %p71 = scmp.eq.s32.totalorder %s12, 1
    %p72 = scmp.ne.s32.totalorder %s67, %s69
    %p73 = scmp.eq.s32.totalorder %s12, 0
    %p74 = por %p72, %p73
    %p75 = scmp.ne.s32.totalorder %s67, %s69
    %p76 = scmp.eq.s32.totalorder %s17, 1
    %p77 = por %p75, %p76
    %p78 = scmp.ne.s32.totalorder %s69, %s70
    %p79 = scmp.eq.s32.totalorder %s17, 0
    %p80 = por %p78, %p79
    %p81 = scmp.ne.s32.totalorder %s69, %s70
    %p82 = scmp.eq.s32.totalorder %s18, 1
    %p83 = por %p81, %p82
    %p85 = scmp.ne.s32.totalorder %s70, %s84
    %p86 = scmp.eq.s32.totalorder %s18, 0
    %p87 = por %p85, %p86
    %s89 = sadd.s32 %s88, 1
    %p92 = scmp.eq.s32.totalorder %s12, 1
    %p93 = scmp.ne.s32.totalorder %s88, %s90
    %p94 = scmp.eq.s32.totalorder %s12, 0
    %p95 = por %p93, %p94
    %p96 = scmp.ne.s32.totalorder %s88, %s90
    %p97 = scmp.eq.s32.totalorder %s17, 1
    %p98 = por %p96, %p97
    %p99 = scmp.ne.s32.totalorder %s90, %s91
    %p100 = scmp.eq.s32.totalorder %s17, 0
    %p101 = por %p99, %p100
    %p102 = scmp.ne.s32.totalorder %s90, %s91
    %p103 = scmp.eq.s32.totalorder %s18, 1
    %p104 = por %p102, %p103
    %p106 = scmp.ne.s32.totalorder %s91, %s105
    %p107 = scmp.eq.s32.totalorder %s18, 0
    %p108 = por %p106, %p107
    %s110 = sadd.s32 %s109, 1
    %p113 = scmp.eq.s32.totalorder %s12, 1
    %p114 = scmp.ne.s32.totalorder %s109, %s111
    %p115 = scmp.eq.s32.totalorder %s12, 0
    %p116 = por %p114, %p115
    %p117 = scmp.ne.s32.totalorder %s109, %s111
    %p118 = scmp.eq.s32.totalorder %s17, 1
    %p119 = por %p117, %p118
    %p120 = scmp.ne.s32.totalorder %s111, %s112
    %p121 = scmp.eq.s32.totalorder %s17, 0
    %p122 = por %p120, %p121
    %p123 = scmp.ne.s32.totalorder %s111, %s112
    %p124 = scmp.eq.s32.totalorder %s18, 1
    %p125 = por %p123, %p124
    %p127 = scmp.ne.s32.totalorder %s112, %s126
    %p128 = scmp.eq.s32.totalorder %s18, 0
    %p129 = por %p127, %p128
    %s131 = sadd.s32 %s130, 1
    %p134 = scmp.eq.s32.totalorder %s12, 1
    %p135 = scmp.ne.s32.totalorder %s130, %s132
    %p136 = scmp.eq.s32.totalorder %s12, 0
    %p137 = por %p135, %p136
    %p138 = scmp.ne.s32.totalorder %s130, %s132
    %p139 = scmp.eq.s32.totalorder %s17, 1
    %p140 = por %p138, %p139
    %p141 = scmp.ne.s32.totalorder %s132, %s133
    %p142 = scmp.eq.s32.totalorder %s17, 0
    %p143 = por %p141, %p142
    %p144 = scmp.ne.s32.totalorder %s132, %s133
    %p145 = scmp.eq.s32.totalorder %s18, 1
    %p146 = por %p144, %p145
    %p148 = scmp.ne.s32.totalorder %s133, %s147
    %p149 = scmp.eq.s32.totalorder %s18, 0
    %p150 = por %p148, %p149
    %s151 = ssub.s32 %s12, %s19
    %p152 = scmp.eq.s32.totalorder %s151, 0
    %s154 = sadd.s32 %s153, 1
    %s155 = scalar_select %p152, %s153, %s154
    %p158 = pneg %p152
    %p159 = scmp.eq.s32.totalorder %s12, 1
    %p160 = por %p158, %p159
    %p161 = scmp.ne.s32.totalorder %s153, %s156
    %p162 = scmp.eq.s32.totalorder %s12, 0
    %p163 = por %p161, %p162
    %p164 = scmp.ne.s32.totalorder %s153, %s156
    %p165 = scmp.eq.s32.totalorder %s17, 1
    %p166 = por %p164, %p165
    %p167 = scmp.ne.s32.totalorder %s156, %s157
    %p168 = scmp.eq.s32.totalorder %s17, 0
    %p169 = por %p167, %p168
    %p170 = scmp.ne.s32.totalorder %s156, %s157
    %p171 = scmp.eq.s32.totalorder %s18, 1
    %p172 = por %p170, %p171
    %p174 = scmp.ne.s32.totalorder %s157, %s173
    %p175 = scmp.eq.s32.totalorder %s18, 0
    %p176 = por %p174, %p175
    %p177 = scmp.le.s32.totalorder 1, %s12
    %p178 = scmp.lt.s32.totalorder %s12, 3
    %p179 = pnand %p177, %p178
    %p180 = pneg %p179
    // Predicated region
    $region9: #{tpu_custom_call.1} parent=5 // pred_check
      _
    $region10: #{tpu_custom_call.1} parent=5 // pred_check_branch
      %182 = sbr.rel (%p179) target = $region12
    $region11: #{tpu_custom_call.1} parent=5 // pred_region
      %s183 = ssub.s32 %s12, 1
      // Predicated region
      $region13: #{tpu_custom_call.1} parent=11 // pred_check
        %p184 = pneg %p33
      $region14: #{tpu_custom_call.1} parent=11 // pred_check_branch
        %186 = sbr.rel (%p184) target = $region16
      $region15: #{tpu_custom_call.1} parent=11 // pred_region
        _
      $region16: #{tpu_custom_call.1} parent=11 // pred_fallthru
        _
      // Predicated region
      $region17: #{tpu_custom_call.1} parent=11 // pred_check
        %p187 = pneg %p80
      $region18: #{tpu_custom_call.1} parent=11 // pred_check_branch
        %189 = sbr.rel (%p187) target = $region20
      $region19: #{tpu_custom_call.1} parent=11 // pred_region
        _
      $region20: #{tpu_custom_call.1} parent=11 // pred_fallthru
        _
      // Predicated region
      $region21: #{tpu_custom_call.1} parent=11 // pred_check
        %p190 = pneg %p101
      $region22: #{tpu_custom_call.1} parent=11 // pred_check_branch
        %192 = sbr.rel (%p190) target = $region24
      $region23: #{tpu_custom_call.1} parent=11 // pred_region
        _
      $region24: #{tpu_custom_call.1} parent=11 // pred_fallthru
        _
      // Predicated region
      $region25: #{tpu_custom_call.1} parent=11 // pred_check
        %p193 = pneg %p122
      $region26: #{tpu_custom_call.1} parent=11 // pred_check_branch
        %195 = sbr.rel (%p193) target = $region28
      $region27: #{tpu_custom_call.1} parent=11 // pred_region
        _
      $region28: #{tpu_custom_call.1} parent=11 // pred_fallthru
        _
      // Predicated region
      $region29: #{tpu_custom_call.1} parent=11 // pred_check
        %p196 = pneg %p143
      $region30: #{tpu_custom_call.1} parent=11 // pred_check_branch
        %198 = sbr.rel (%p196) target = $region32
      $region31: #{tpu_custom_call.1} parent=11 // pred_region
        _
      $region32: #{tpu_custom_call.1} parent=11 // pred_fallthru
        _
    $region12: #{tpu_custom_call.1} parent=5 // pred_fallthru
      _
    %p199 = scmp.lt.s32.totalorder %s12, 2
    // Predicated region
    $region33: #{tpu_custom_call.1} parent=5 // pred_check
      %p200 = pneg %p199
    $region34: #{tpu_custom_call.1} parent=5 // pred_check_branch
      %202 = sbr.rel (%p200) target = $region36
    $region35: #{tpu_custom_call.1} parent=5 // pred_region
      // Predicated region
      $region37: #{tpu_custom_call.1} parent=35 // pred_check
        %p203 = pneg %p53
      $region38: #{tpu_custom_call.1} parent=35 // pred_check_branch
        %205 = sbr.rel (%p203) target = $region40
      $region39: #{tpu_custom_call.1} parent=35 // pred_region
        %s206 = smul.u32 2, %s12
        %p207 = scmp.lt.s32.totalorder %s206, 3
        %s208 = scalar_select %p207, %s206, 3
        %s209 = smul.addr %s208, 4
        %s210 = scalar_lea.vmem %s1, %s209
        %s211 = smul.u32 2, %s12
      $region40: #{tpu_custom_call.1} parent=35 // pred_fallthru
        _
    $region36: #{tpu_custom_call.1} parent=5 // pred_fallthru
      _
    %p212 = scmp.le.s32.totalorder 1, %s12
    %p213 = scmp.lt.s32.totalorder %s12, 3
    %p214 = pnand %p212, %p213
    %p215 = pneg %p214
    // Predicated region
    $region41: #{tpu_custom_call.1} parent=5 // pred_check
      _
    $region42: #{tpu_custom_call.1} parent=5 // pred_check_branch
      %217 = sbr.rel (%p214) target = $region44
    $region43: #{tpu_custom_call.1} parent=5 // pred_region
      %s218 = ssub.s32 %s12, 1
      %p219 = pneg %p33
      %p220 = pneg %p30
      %s221 = smul.u32 2, %s17
      %p222 = scmp.lt.s32.totalorder %s221, 3
      %s223 = scalar_select %p222, %s221, 3
      %s224 = smul.addr %s223, 4
      %s225 = scalar_lea.vmem %s1, %s224
      %p226 = pneg %p59
      %p227 = pneg %p56
      %p228 = pneg %p80
      %p229 = pneg %p77
      %p230 = pneg %p101
      %p231 = pneg %p98
      %p232 = pneg %p122
      %p233 = pneg %p119
      %p234 = pneg %p143
      %p235 = pneg %p140
      %p236 = pneg %p169
      %p237 = pneg %p166
      %s238 = smul.u32 2, %s17
      %p239 = scmp.lt.s32.totalorder %s238, 3
      %s240 = scalar_select %p239, %s238, 3
      %s241 = smul.addr %s240, 8
      %s242 = scalar_lea.vmem %s6, %s241
      %s243 = smul.u32 2, %s17
      %p244 = scmp.lt.s32.totalorder %s243, 3
      %s245 = scalar_select %p244, %s243, 3
      %s246 = smul.addr %s245, 4
      %s247 = scalar_lea.vmem %s1, %s246
      %s248 = smul.u32 2, %s17
      %s249 = smul.u32 2, %s17
      %p250 = scmp.lt.s32.totalorder %s249, 3
      %s251 = scalar_select %p250, %s249, 3
      %s252 = smul.addr %s251, 8
      %s253 = scalar_lea.vmem %s6, %s252
      %s254 = smul.u32 2, %s17
      %s255 = smul.u32 %s17, 16
      %s256 = scalar_lea.vmem %s0, %s255
      %v257 = vld [vmem:[%s256] sm:$0xff]
      %v258 = vld [vmem:[%s256 + $0x8] sm:$0xff]
      %v259 = vld [vmem:[%s2] sm:$0xff]
      %v260 = vld [vmem:[%s3] sm:$0x1]
      %v262 = vperm.slane %v260, 0
      %vm264 = vcmask 64512
      %v266 = vsel %vm264, %v257, 0
      %v269 = vsel %vm264, %v258, 0
      %271 = vmatpush.msra.mxu0 0.0
      %272 = vmatpush.msra.mxu0 0.0
      %273 = vmatpush.msra.mxu0 0.0
      %274 = vmatpush.msra.mxu0 0.0
      %275 = vmatpush.msra.mxu0 0.0
      %276 = vmatpush.msra.mxu0 0.0
      %277 = vmatpush.msra.mxu0 0.0
      %278 = vmatpush.msra.mxu0 0.0
      %279 = vmatpush.msra.mxu0 0.0
      %280 = vmatpush.msra.mxu0 0.0
      %281 = vmatpush.msra.mxu0 0.0
      %282 = vmatpush.msra.mxu0 0.0
      %283 = vmatpush.msra.mxu0 0.0
      %284 = vmatpush.msra.mxu0 0.0
      %285 = vmatpush.msra.mxu0 0.0
      %286 = vmatpush.msra.mxu0 %v259
      %287 = vmatmul.f32.gmra.mxu0 %v266
      %v288 = vpop.f32.mrf.mxu0
      %v289 = vadd.f32 %v262, %v288
      %290 = vmatmul.f32.gmra.mxu0 %v269
      %v291 = vpop.f32.mrf.mxu0
      %v292 = vadd.f32 %v262, %v291
      %293 = vdwg.mxu0
      %v294 = vld [vmem:[%s0] sm:$0xff]
      %v295 = vld [vmem:[%s0 + $0x8] sm:$0xff]
      %v296 = vld [vmem:[%s0 + $0x10] sm:$0xff]
      %v297 = vld [vmem:[%s0 + $0x18] sm:$0xff]
      %v298 = vld [vmem:[%s4] sm:$0xff]
      %v299 = vld [vmem:[%s5] sm:$0x1]
      %v301 = vperm.slane %v299, 0
      %v304 = vsel %vm264, %v294, 0
      %v307 = vsel %vm264, %v295, 0
      %v310 = vsel %vm264, %v296, 0
      %v313 = vsel %vm264, %v297, 0
      %315 = vmatpush.msra.mxu0 0.0
      %316 = vmatpush.msra.mxu0 0.0
      %317 = vmatpush.msra.mxu0 0.0
      %318 = vmatpush.msra.mxu0 0.0
      %319 = vmatpush.msra.mxu0 0.0
      %320 = vmatpush.msra.mxu0 0.0
      %321 = vmatpush.msra.mxu0 0.0
      %322 = vmatpush.msra.mxu0 0.0
      %323 = vmatpush.msra.mxu0 0.0
      %324 = vmatpush.msra.mxu0 0.0
      %325 = vmatpush.msra.mxu0 0.0
      %326 = vmatpush.msra.mxu0 0.0
      %327 = vmatpush.msra.mxu0 0.0
      %328 = vmatpush.msra.mxu0 0.0
      %329 = vmatpush.msra.mxu0 0.0
      %330 = vmatpush.msra.mxu0 %v298
      %331 = vmatmul.f32.gmra.mxu0 %v304
      %v332 = vpop.f32.mrf.mxu0
      %v333 = vadd.f32 %v301, %v332
      %334 = vmatmul.f32.gmra.mxu0 %v307
      %v335 = vpop.f32.mrf.mxu0
      %v336 = vadd.f32 %v301, %v335
      %337 = vmatmul.f32.gmra.mxu0 %v310
      %v338 = vpop.f32.mrf.mxu0
      %v339 = vadd.f32 %v301, %v338
      %340 = vmatmul.f32.gmra.mxu0 %v313
      %v341 = vpop.f32.mrf.mxu0
      %v342 = vadd.f32 %v301, %v341
      %343 = vdwg.mxu0
      %v344 = vld [vmem:[%s247] sm:$0xf]
      %v345 = vld [vmem:[%s247 + $0x4] sm:$0xf]
      %v346 = vunpack.c.l.bf16 %v344
      %v347 = vunpack.c.l.bf16 %v345
      %v348 = vsub.f32 1.0, %v346
      %v349 = vsub.f32 1.0, %v347
      %v350 = vmul.f32 %v348, -1e+30
      %v351 = vmul.f32 %v349, -1e+30
      %vm352 = vcmask 261120
      %v353 = vsel %vm352, %v346, 0.0
      %354 = vadd.xlane.f32.xlu0 %v353
      %v355 = vpop.xlane.xlu0 %354
      %v356 = vsel %vm352, %v347, 0.0
      %357 = vadd.xlane.f32.xlu0 %v356
      %v358 = vpop.xlane.xlu0 %357
      %vm359 = vcmp.gt.f32.partialorder %v355, 0.0
      %vm360 = vcmp.gt.f32.partialorder %v358, 0.0
      %vm361 = vcmask 130048
      %v363 = vsel %vm361, %v289, 0
      %v366 = vsel %vm361, %v292, 0
      %v369 = vsel %vm361, %v333, 0
      %v372 = vsel %vm361, %v336, 0
      %v375 = vsel %vm361, %v339, 0
      %v378 = vsel %vm361, %v342, 0
      %380 = vmatpush.xpose.msra.mxu0 0.0
      %381 = vmatpush.xpose.msra.mxu0 0.0
      %382 = vmatpush.xpose.msra.mxu0 0.0
      %383 = vmatpush.xpose.msra.mxu0 0.0
      %384 = vmatpush.xpose.msra.mxu0 0.0
      %385 = vmatpush.xpose.msra.mxu0 0.0
      %386 = vmatpush.xpose.msra.mxu0 0.0
      %387 = vmatpush.xpose.msra.mxu0 0.0
      %388 = vmatpush.xpose.msra.mxu0 0.0
      %389 = vmatpush.xpose.msra.mxu0 0.0
      %390 = vmatpush.xpose.msra.mxu0 0.0
      %391 = vmatpush.xpose.msra.mxu0 0.0
      %392 = vmatpush.xpose.msra.mxu0 %v378
      %393 = vmatpush.xpose.msra.mxu0 %v375
      %394 = vmatpush.xpose.msra.mxu0 %v372
      %395 = vmatpush.xpose.msra.mxu0 %v369
      %396 = vmatmul.f32.gmra.mxu0 %v363
      %v397 = vpop.f32.mrf.mxu0
      %v398 = vadd.f32 %v350, %v397
      %399 = vmatmul.f32.gmra.mxu0 %v366
      %v400 = vpop.f32.mrf.mxu0
      %v401 = vadd.f32 %v351, %v400
      %402 = vdwg.mxu0
      %v403 = vsel %vm352, %v398, -inf
      %404 = vmax.xlane.f32.xlu0 %v403
      %v405 = vpop.xlane.xlu0 %404
      %v406 = vsel %vm352, %v401, -inf
      %407 = vmax.xlane.f32.xlu0 %v406
      %v408 = vpop.xlane.xlu0 %407
      %v409 = vsub.f32 %v398, %v405
      %v410 = vsub.f32 %v401, %v408
      %v411 = vmul.f32 %v409, 1.442695
      %v412 = vpow.pop %v411
      %v413 = vmul.f32 %v410, 1.442695
      %v414 = vpow.pop %v413
      %v415 = vsel %vm352, %v412, 0.0
      %416 = vadd.xlane.f32.xlu0 %v415
      %v417 = vpop.xlane.xlu0 %416
      %v418 = vsel %vm352, %v414, 0.0
      %419 = vadd.xlane.f32.xlu0 %v418
      %v420 = vpop.xlane.xlu0 %419
      %v421 = vrcp.pop %v417
      %v422 = vrcp.pop %v420
      %v423 = vsel %vm359, %v421, 0.0
      %v424 = vsel %vm360, %v422, 0.0
      %v425 = vmul.f32 %v412, %v423
      %v426 = vmul.f32 %v414, %v424
      %427 = vrot.lane.b32.xlu0 %v333, 64
      %v428 = vpop.permute.xlu0 %427
      %429 = vrot.lane.b32.xlu0 %v336, 64
      %v430 = vpop.permute.xlu0 %429
      %431 = vrot.lane.b32.xlu0 %v339, 64
      %v432 = vpop.permute.xlu0 %431
      %433 = vrot.lane.b32.xlu0 %v342, 64
      %v434 = vpop.permute.xlu0 %433
      %v440 = vsel %vm352, %v425, 0
      %v443 = vsel %vm352, %v426, 0
      %445 = vmatpush.msra.mxu0 0.0
      %446 = vmatpush.msra.mxu0 0.0
      %447 = vmatpush.msra.mxu0 0.0
      %448 = vmatpush.msra.mxu0 0.0
      %449 = vmatpush.msra.mxu0 0.0
      %450 = vmatpush.msra.mxu0 0.0
      %451 = vmatpush.msra.mxu0 0.0
      %452 = vmatpush.msra.mxu0 0.0
      %453 = vmatpush.msra.mxu0 0.0
      %454 = vmatpush.msra.mxu0 0.0
      %455 = vmatpush.msra.mxu0 0.0
      %456 = vmatpush.msra.mxu0 0.0
      %457 = vmatpush.msra.mxu0 %v434
      %458 = vmatpush.msra.mxu0 %v432
      %459 = vmatpush.msra.mxu0 %v430
      %460 = vmatpush.msra.mxu0 %v428
      %461 = vmatmul.f32.gmra.mxu0 %v440
      %v462 = vpop.f32.mrf.mxu0
      %v463 = vadd.f32 0.0, %v462
      %464 = vmatmul.f32.gmra.mxu0 %v443
      %v465 = vpop.f32.mrf.mxu0
      %v466 = vadd.f32 0.0, %v465
      %467 = vdwg.mxu0
      %470 = vrot.lane.b32.xlu0 %v463, 64
      %v471 = vpop.permute.xlu0 %470
      %472 = vrot.lane.b32.xlu0 %v466, 64
      %v473 = vpop.permute.xlu0 %472
      %v476 = vadd.f32 %v289, %v471
      %v477 = vadd.f32 %v292, %v473
      %478 = vrot.lane.b32.xlu0 %v289, 112
      %v479 = vpop.permute.xlu0 %478
      %480 = vrot.lane.b32.xlu0 %v292, 112
      %v481 = vpop.permute.xlu0 %480
      %482 = vrot.lane.b32.xlu0 %v333, 112
      %v483 = vpop.permute.xlu0 %482
      %484 = vrot.lane.b32.xlu0 %v336, 112
      %v485 = vpop.permute.xlu0 %484
      %486 = vrot.lane.b32.xlu0 %v339, 112
      %v487 = vpop.permute.xlu0 %486
      %488 = vrot.lane.b32.xlu0 %v342, 112
      %v489 = vpop.permute.xlu0 %488
      %v490 = vsel %vm361, %v479, 0
      %v492 = vsel %vm361, %v481, 0
      %v494 = vsel %vm361, %v483, 0
      %v496 = vsel %vm361, %v485, 0
      %v498 = vsel %vm361, %v487, 0
      %v500 = vsel %vm361, %v489, 0
      %502 = vmatpush.xpose.msra.mxu0 0.0
      %503 = vmatpush.xpose.msra.mxu0 0.0
      %504 = vmatpush.xpose.msra.mxu0 0.0
      %505 = vmatpush.xpose.msra.mxu0 0.0
      %506 = vmatpush.xpose.msra.mxu0 0.0
      %507 = vmatpush.xpose.msra.mxu0 0.0
      %508 = vmatpush.xpose.msra.mxu0 0.0
      %509 = vmatpush.xpose.msra.mxu0 0.0
      %510 = vmatpush.xpose.msra.mxu0 0.0
      %511 = vmatpush.xpose.msra.mxu0 0.0
      %512 = vmatpush.xpose.msra.mxu0 0.0
      %513 = vmatpush.xpose.msra.mxu0 0.0
      %514 = vmatpush.xpose.msra.mxu0 %v500
      %515 = vmatpush.xpose.msra.mxu0 %v498
      %516 = vmatpush.xpose.msra.mxu0 %v496
      %517 = vmatpush.xpose.msra.mxu0 %v494
      %518 = vmatmul.f32.gmra.mxu0 %v490
      %v519 = vpop.f32.mrf.mxu0
      %v520 = vadd.f32 %v350, %v519
      %521 = vmatmul.f32.gmra.mxu0 %v492
      %v522 = vpop.f32.mrf.mxu0
      %v523 = vadd.f32 %v351, %v522
      %524 = vdwg.mxu0
      %v525 = vsel %vm352, %v520, -inf
      %526 = vmax.xlane.f32.xlu0 %v525
      %v527 = vpop.xlane.xlu0 %526
      %v528 = vsel %vm352, %v523, -inf
      %529 = vmax.xlane.f32.xlu0 %v528
      %v530 = vpop.xlane.xlu0 %529
      %v531 = vsub.f32 %v520, %v527
      %v532 = vsub.f32 %v523, %v530
      %v533 = vmul.f32 %v531, 1.442695
      %v534 = vpow.pop %v533
      %v535 = vmul.f32 %v532, 1.442695
      %v536 = vpow.pop %v535
      %v537 = vsel %vm352, %v534, 0.0
      %538 = vadd.xlane.f32.xlu0 %v537
      %v539 = vpop.xlane.xlu0 %538
      %v540 = vsel %vm352, %v536, 0.0
      %541 = vadd.xlane.f32.xlu0 %v540
      %v542 = vpop.xlane.xlu0 %541
      %v543 = vrcp.pop %v539
      %v544 = vrcp.pop %v542
      %v545 = vsel %vm359, %v543, 0.0
      %v546 = vsel %vm360, %v544, 0.0
      %v547 = vmul.f32 %v534, %v545
      %v548 = vmul.f32 %v536, %v546
      %549 = vrot.lane.b32.xlu0 %v333, 48
      %v550 = vpop.permute.xlu0 %549
      %551 = vrot.lane.b32.xlu0 %v336, 48
      %v552 = vpop.permute.xlu0 %551
      %553 = vrot.lane.b32.xlu0 %v339, 48
      %v554 = vpop.permute.xlu0 %553
      %555 = vrot.lane.b32.xlu0 %v342, 48
      %v556 = vpop.permute.xlu0 %555
      %v562 = vsel %vm352, %v547, 0
      %v565 = vsel %vm352, %v548, 0
      %567 = vmatpush.msra.mxu0 0.0
      %568 = vmatpush.msra.mxu0 0.0
      %569 = vmatpush.msra.mxu0 0.0
      %570 = vmatpush.msra.mxu0 0.0
      %571 = vmatpush.msra.mxu0 0.0
      %572 = vmatpush.msra.mxu0 0.0
      %573 = vmatpush.msra.mxu0 0.0
      %574 = vmatpush.msra.mxu0 0.0
      %575 = vmatpush.msra.mxu0 0.0
      %576 = vmatpush.msra.mxu0 0.0
      %577 = vmatpush.msra.mxu0 0.0
      %578 = vmatpush.msra.mxu0 0.0
      %579 = vmatpush.msra.mxu0 %v556
      %580 = vmatpush.msra.mxu0 %v554
      %581 = vmatpush.msra.mxu0 %v552
      %582 = vmatpush.msra.mxu0 %v550
      %583 = vmatmul.f32.gmra.mxu0 %v562
      %v584 = vpop.f32.mrf.mxu0
      %v585 = vadd.f32 0.0, %v584
      %586 = vmatmul.f32.gmra.mxu0 %v565
      %v587 = vpop.f32.mrf.mxu0
      %v588 = vadd.f32 0.0, %v587
      %589 = vdwg.mxu0
      %592 = vrot.lane.b32.xlu0 %v585, 64
      %v593 = vpop.permute.xlu0 %592
      %594 = vrot.lane.b32.xlu0 %v588, 64
      %v595 = vpop.permute.xlu0 %594
      %v598 = vadd.f32 %v476, %v593
      %v599 = vadd.f32 %v477, %v595
      %600 = vrot.lane.b32.xlu0 %v289, 96
      %v601 = vpop.permute.xlu0 %600
      %602 = vrot.lane.b32.xlu0 %v292, 96
      %v603 = vpop.permute.xlu0 %602
      %604 = vrot.lane.b32.xlu0 %v333, 96
      %v605 = vpop.permute.xlu0 %604
      %606 = vrot.lane.b32.xlu0 %v336, 96
      %v607 = vpop.permute.xlu0 %606
      %608 = vrot.lane.b32.xlu0 %v339, 96
      %v609 = vpop.permute.xlu0 %608
      %610 = vrot.lane.b32.xlu0 %v342, 96
      %v611 = vpop.permute.xlu0 %610
      %v612 = vsel %vm361, %v601, 0
      %v614 = vsel %vm361, %v603, 0
      %v616 = vsel %vm361, %v605, 0
      %v618 = vsel %vm361, %v607, 0
      %v620 = vsel %vm361, %v609, 0
      %v622 = vsel %vm361, %v611, 0
      %624 = vmatpush.xpose.msra.mxu0 0.0
      %625 = vmatpush.xpose.msra.mxu0 0.0
      %626 = vmatpush.xpose.msra.mxu0 0.0
      %627 = vmatpush.xpose.msra.mxu0 0.0
      %628 = vmatpush.xpose.msra.mxu0 0.0
      %629 = vmatpush.xpose.msra.mxu0 0.0
      %630 = vmatpush.xpose.msra.mxu0 0.0
      %631 = vmatpush.xpose.msra.mxu0 0.0
      %632 = vmatpush.xpose.msra.mxu0 0.0
      %633 = vmatpush.xpose.msra.mxu0 0.0
      %634 = vmatpush.xpose.msra.mxu0 0.0
      %635 = vmatpush.xpose.msra.mxu0 0.0
      %636 = vmatpush.xpose.msra.mxu0 %v622
      %637 = vmatpush.xpose.msra.mxu0 %v620
      %638 = vmatpush.xpose.msra.mxu0 %v618
      %639 = vmatpush.xpose.msra.mxu0 %v616
      %640 = vmatmul.f32.gmra.mxu0 %v612
      %v641 = vpop.f32.mrf.mxu0
      %v642 = vadd.f32 %v350, %v641
      %643 = vmatmul.f32.gmra.mxu0 %v614
      %v644 = vpop.f32.mrf.mxu0
      %v645 = vadd.f32 %v351, %v644
      %646 = vdwg.mxu0
      %v647 = vsel %vm352, %v642, -inf
      %648 = vmax.xlane.f32.xlu0 %v647
      %v649 = vpop.xlane.xlu0 %648
      %v650 = vsel %vm352, %v645, -inf
      %651 = vmax.xlane.f32.xlu0 %v650
      %v652 = vpop.xlane.xlu0 %651
      %v653 = vsub.f32 %v642, %v649
      %v654 = vsub.f32 %v645, %v652
      %v655 = vmul.f32 %v653, 1.442695
      %v656 = vpow.pop %v655
      %v657 = vmul.f32 %v654, 1.442695
      %v658 = vpow.pop %v657
      %v659 = vsel %vm352, %v656, 0.0
      %660 = vadd.xlane.f32.xlu0 %v659
      %v661 = vpop.xlane.xlu0 %660
      %v662 = vsel %vm352, %v658, 0.0
      %663 = vadd.xlane.f32.xlu0 %v662
      %v664 = vpop.xlane.xlu0 %663
      %v665 = vrcp.pop %v661
      %v666 = vrcp.pop %v664
      %v667 = vsel %vm359, %v665, 0.0
      %v668 = vsel %vm360, %v666, 0.0
      %v669 = vmul.f32 %v656, %v667
      %v670 = vmul.f32 %v658, %v668
      %671 = vrot.lane.b32.xlu0 %v333, 32
      %v672 = vpop.permute.xlu0 %671
      %673 = vrot.lane.b32.xlu0 %v336, 32
      %v674 = vpop.permute.xlu0 %673
      %675 = vrot.lane.b32.xlu0 %v339, 32
      %v676 = vpop.permute.xlu0 %675
      %677 = vrot.lane.b32.xlu0 %v342, 32
      %v678 = vpop.permute.xlu0 %677
      %v684 = vsel %vm352, %v669, 0
      %v687 = vsel %vm352, %v670, 0
      %689 = vmatpush.msra.mxu0 0.0
      %690 = vmatpush.msra.mxu0 0.0
      %691 = vmatpush.msra.mxu0 0.0
      %692 = vmatpush.msra.mxu0 0.0
      %693 = vmatpush.msra.mxu0 0.0
      %694 = vmatpush.msra.mxu0 0.0
      %695 = vmatpush.msra.mxu0 0.0
      %696 = vmatpush.msra.mxu0 0.0
      %697 = vmatpush.msra.mxu0 0.0
      %698 = vmatpush.msra.mxu0 0.0
      %699 = vmatpush.msra.mxu0 0.0
      %700 = vmatpush.msra.mxu0 0.0
      %701 = vmatpush.msra.mxu0 %v678
      %702 = vmatpush.msra.mxu0 %v676
      %703 = vmatpush.msra.mxu0 %v674
      %704 = vmatpush.msra.mxu0 %v672
      %705 = vmatmul.f32.gmra.mxu0 %v684
      %v706 = vpop.f32.mrf.mxu0
      %v707 = vadd.f32 0.0, %v706
      %708 = vmatmul.f32.gmra.mxu0 %v687
      %v709 = vpop.f32.mrf.mxu0
      %v710 = vadd.f32 0.0, %v709
      %711 = vdwg.mxu0
      %714 = vrot.lane.b32.xlu0 %v707, 64
      %v715 = vpop.permute.xlu0 %714
      %716 = vrot.lane.b32.xlu0 %v710, 64
      %v717 = vpop.permute.xlu0 %716
      %v720 = vadd.f32 %v598, %v715
      %v721 = vadd.f32 %v599, %v717
      %722 = vrot.lane.b32.xlu0 %v289, 80
      %v723 = vpop.permute.xlu0 %722
      %724 = vrot.lane.b32.xlu0 %v292, 80
      %v725 = vpop.permute.xlu0 %724
      %726 = vrot.lane.b32.xlu0 %v333, 80
      %v727 = vpop.permute.xlu0 %726
      %728 = vrot.lane.b32.xlu0 %v336, 80
      %v729 = vpop.permute.xlu0 %728
      %730 = vrot.lane.b32.xlu0 %v339, 80
      %v731 = vpop.permute.xlu0 %730
      %732 = vrot.lane.b32.xlu0 %v342, 80
      %v733 = vpop.permute.xlu0 %732
      %v734 = vsel %vm361, %v723, 0
      %v736 = vsel %vm361, %v725, 0
      %v738 = vsel %vm361, %v727, 0
      %v740 = vsel %vm361, %v729, 0
      %v742 = vsel %vm361, %v731, 0
      %v744 = vsel %vm361, %v733, 0
      %746 = vmatpush.xpose.msra.mxu0 0.0
      %747 = vmatpush.xpose.msra.mxu0 0.0
      %748 = vmatpush.xpose.msra.mxu0 0.0
      %749 = vmatpush.xpose.msra.mxu0 0.0
      %750 = vmatpush.xpose.msra.mxu0 0.0
      %751 = vmatpush.xpose.msra.mxu0 0.0
      %752 = vmatpush.xpose.msra.mxu0 0.0
      %753 = vmatpush.xpose.msra.mxu0 0.0
      %754 = vmatpush.xpose.msra.mxu0 0.0
      %755 = vmatpush.xpose.msra.mxu0 0.0
      %756 = vmatpush.xpose.msra.mxu0 0.0
      %757 = vmatpush.xpose.msra.mxu0 0.0
      %758 = vmatpush.xpose.msra.mxu0 %v744
      %759 = vmatpush.xpose.msra.mxu0 %v742
      %760 = vmatpush.xpose.msra.mxu0 %v740
      %761 = vmatpush.xpose.msra.mxu0 %v738
      %762 = vmatmul.f32.gmra.mxu0 %v734
      %v763 = vpop.f32.mrf.mxu0
      %v764 = vadd.f32 %v350, %v763
      %765 = vmatmul.f32.gmra.mxu0 %v736
      %v766 = vpop.f32.mrf.mxu0
      %v767 = vadd.f32 %v351, %v766
      %768 = vdwg.mxu0
      %v769 = vsel %vm352, %v764, -inf
      %770 = vmax.xlane.f32.xlu0 %v769
      %v771 = vpop.xlane.xlu0 %770
      %v772 = vsel %vm352, %v767, -inf
      %773 = vmax.xlane.f32.xlu0 %v772
      %v774 = vpop.xlane.xlu0 %773
      %v775 = vsub.f32 %v764, %v771
      %v776 = vsub.f32 %v767, %v774
      %v777 = vmul.f32 %v775, 1.442695
      %v778 = vpow.pop %v777
      %v779 = vmul.f32 %v776, 1.442695
      %v780 = vpow.pop %v779
      %v781 = vsel %vm352, %v778, 0.0
      %782 = vadd.xlane.f32.xlu0 %v781
      %v783 = vpop.xlane.xlu0 %782
      %v784 = vsel %vm352, %v780, 0.0
      %785 = vadd.xlane.f32.xlu0 %v784
      %v786 = vpop.xlane.xlu0 %785
      %v787 = vrcp.pop %v783
      %v788 = vrcp.pop %v786
      %v789 = vsel %vm359, %v787, 0.0
      %v790 = vsel %vm360, %v788, 0.0
      %v791 = vmul.f32 %v778, %v789
      %v792 = vmul.f32 %v780, %v790
      %793 = vrot.lane.b32.xlu0 %v333, 16
      %v794 = vpop.permute.xlu0 %793
      %795 = vrot.lane.b32.xlu0 %v336, 16
      %v796 = vpop.permute.xlu0 %795
      %797 = vrot.lane.b32.xlu0 %v339, 16
      %v798 = vpop.permute.xlu0 %797
      %799 = vrot.lane.b32.xlu0 %v342, 16
      %v800 = vpop.permute.xlu0 %799
      %v806 = vsel %vm352, %v791, 0
      %v809 = vsel %vm352, %v792, 0
      %811 = vmatpush.msra.mxu0 0.0
      %812 = vmatpush.msra.mxu0 0.0
      %813 = vmatpush.msra.mxu0 0.0
      %814 = vmatpush.msra.mxu0 0.0
      %815 = vmatpush.msra.mxu0 0.0
      %816 = vmatpush.msra.mxu0 0.0
      %817 = vmatpush.msra.mxu0 0.0
      %818 = vmatpush.msra.mxu0 0.0
      %819 = vmatpush.msra.mxu0 0.0
      %820 = vmatpush.msra.mxu0 0.0
      %821 = vmatpush.msra.mxu0 0.0
      %822 = vmatpush.msra.mxu0 0.0
      %823 = vmatpush.msra.mxu0 %v800
      %824 = vmatpush.msra.mxu0 %v798
      %825 = vmatpush.msra.mxu0 %v796
      %826 = vmatpush.msra.mxu0 %v794
      %827 = vmatmul.f32.gmra.mxu0 %v806
      %v828 = vpop.f32.mrf.mxu0
      %v829 = vadd.f32 0.0, %v828
      %830 = vmatmul.f32.gmra.mxu0 %v809
      %v831 = vpop.f32.mrf.mxu0
      %v832 = vadd.f32 0.0, %v831
      %833 = vdwg.mxu0
      %836 = vrot.lane.b32.xlu0 %v829, 64
      %v837 = vpop.permute.xlu0 %836
      %838 = vrot.lane.b32.xlu0 %v832, 64
      %v839 = vpop.permute.xlu0 %838
      %v842 = vadd.f32 %v720, %v837
      %v843 = vadd.f32 %v721, %v839
      %v844 = vmax.f32 %v842, 0.0
      %v845 = vmax.f32 %v843, 0.0
      %848 = vrot.lane.b32.xlu0 %v844, 64
      %v849 = vpop.permute.xlu0 %848
      %850 = vrot.lane.b32.xlu0 %v845, 64
      %v851 = vpop.permute.xlu0 %850
      %854 = vst.msk [vmem:[%s253] sm:$0xff] %vm361, %v849
      %855 = vst.msk [vmem:[%s253 + $0x8] sm:$0xff] %vm361, %v851
      %s856 = smul.u32 2, %s17
      %p857 = scmp.lt.s32.totalorder %s856, 3
      %s858 = scalar_select %p857, %s856, 3
      %s859 = smul.addr %s858, 8
      %s860 = scalar_lea.vmem %s6, %s859
      // Predicated region
      $region45: #{tpu_custom_call.1} parent=43 // pred_check
        %p861 = pneg %p166
      $region46: #{tpu_custom_call.1} parent=43 // pred_check_branch
        %863 = sbr.rel (%p861) target = $region48
      $region47: #{tpu_custom_call.1} parent=43 // pred_region
        %s864 = smul.u32 2, %s17
      $region48: #{tpu_custom_call.1} parent=43 // pred_fallthru
        _
    $region44: #{tpu_custom_call.1} parent=5 // pred_fallthru
      _
    %p865 = scmp.le.s32.totalorder 2, %s12
    // Predicated region
    $region49: #{tpu_custom_call.1} parent=5 // pred_check
      %p866 = pneg %p865
    $region50: #{tpu_custom_call.1} parent=5 // pred_check_branch
      %868 = sbr.rel (%p866) target = $region52
    $region51: #{tpu_custom_call.1} parent=5 // pred_region
      %s869 = ssub.s32 %s12, 2
      // Predicated region
      $region53: #{tpu_custom_call.1} parent=51 // pred_check
        %p870 = pneg %p172
      $region54: #{tpu_custom_call.1} parent=51 // pred_check_branch
        %872 = sbr.rel (%p870) target = $region56
      $region55: #{tpu_custom_call.1} parent=51 // pred_region
        %s873 = smul.u32 2, %s18
        %p874 = scmp.lt.s32.totalorder %s873, 3
        %s875 = scalar_select %p874, %s873, 3
        %s876 = smul.addr %s875, 8
        %s877 = scalar_lea.vmem %s6, %s876
      $region56: #{tpu_custom_call.1} parent=51 // pred_fallthru
        _
    $region52: #{tpu_custom_call.1} parent=5 // pred_fallthru
      _
  $region6: #{tpu_custom_call.1} parent=0 // loop_footer
    %s16 = sadd.s32 1, %s12
  $region7: #{tpu_custom_call.1} parent=0 // loop_footer_branch
    %11 = sbr.rel target = $region3
  $region8: #{tpu_custom_call.1} parent=0 // loop_exit
    _

</llo_original>
